<compile_context>
chip_gen: v6e
topology: v6e:2x2x1
jax: 0.10.0
libtpu: 0.0.40
codegen_flags: <defaults>
</compile_context>

<pallas_src>
import jax
import jax.numpy as jnp
from jax.experimental import pallas as pl
from jax.experimental.pallas import tpu as pltpu


def fcnet_kernel(scale_ref, x_ref, v_ref, b_ref, o_ref):
    # scale_ref: (1, 1) f32 in SMEM  -- precomputed g / ||V||_F
    # x_ref:     (tm, K)  input row tile        (f32 or bf16)
    # v_ref:     (K, tn)  un-normalized weight slab, pre-transposed (f32 or bf16)
    # b_ref:     (1, tn)  bias slab (f32)
    # o_ref:     (tm, tn) output tile (f32)
    y = jnp.dot(x_ref[...], v_ref[...], preferred_element_type=jnp.float32)
    # weight_norm(dim=None) applied as a scalar on the dot output (identical math,
    # tm*tn work instead of K*N per grid step).
    y = y * scale_ref[0, 0] + b_ref[...]
    o_ref[...] = jnp.maximum(y, 0.0).astype(o_ref.dtype)


def _round_up(a, m):
    return (a + m - 1) // m * m


def fcnet_forward(x, v, g, b, *, tm=256, tn=512, compute_dtype=jnp.float32):
    """FCNet forward: ReLU(x @ (g * V / ||V||_F).T + b).

    x: (M, K) float32
    v: (N, K) un-normalized weight V (torch nn.Linear layout: (out, in))
    g: scalar gain (reshapeable to ()), from weight_norm(dim=None)
    b: (N,) or (1, N) bias
    Returns (M, N) float32.
    """
    M, K = x.shape
    N, Kv = v.shape
    assert K == Kv, "x / weight inner-dim mismatch"

    v = jnp.asarray(v, jnp.float32)
    b = jnp.asarray(b, jnp.float32).reshape(1, N)

    # Hoisted weight_norm(dim=None): one scalar, computed once outside the grid.
    scale = (jnp.asarray(g, jnp.float32).reshape(())
             / jnp.sqrt(jnp.sum(v * v))).reshape(1, 1)

    v_t = v.T  # (K, N): kernel does a plain row-major matmul

    # Tile sizes: large row tiles; lane-dense (multiple-of-128) column tiles.
    tm = min(tm, _round_up(M, 8))
    tn = min(tn, _round_up(N, 128))
    m_pad = _round_up(M, tm)
    n_pad = _round_up(N, tn)
    if m_pad != M:
        x = jnp.pad(x, ((0, m_pad - M), (0, 0)))
    if n_pad != N:
        v_t = jnp.pad(v_t, ((0, 0), (0, n_pad - N)))
        b = jnp.pad(b, ((0, 0), (0, n_pad - N)))

    x_c = x.astype(compute_dtype)
    v_c = v_t.astype(compute_dtype)

    grid = (m_pad // tm, n_pad // tn)

    out = pl.pallas_call(
        fcnet_kernel,
        out_shape=jax.ShapeDtypeStruct((m_pad, n_pad), jnp.float32),
        grid_spec=pltpu.PrefetchScalarGridSpec(
            num_scalar_prefetch=0,
            grid=grid,
            in_specs=[
                pl.BlockSpec(memory_space=pltpu.SMEM),          # scale (whole, SMEM)
                pl.BlockSpec((tm, K), lambda i, j: (i, 0)),     # x row tile
                pl.BlockSpec((K, tn), lambda i, j: (0, j)),     # weight column slab
                pl.BlockSpec((1, tn), lambda i, j: (0, j)),     # bias slab
            ],
            out_specs=pl.BlockSpec((tm, tn), lambda i, j: (i, j)),
        ),
        compiler_params=pltpu.CompilerParams(
            dimension_semantics=("parallel", "parallel"),
        ),
    )(scale, x_c, v_c, b)

    return out[:M, :N]


if __name__ == "__main__":
    # FCNet(dims=[64, 32], act='ReLU', dropout=0.0)
    in_dim, out_dim = 64, 32
    batch = 16

    key = jax.random.PRNGKey(0)
    kx, kv, kg, kb = jax.random.split(key, 4)

    x = jax.random.normal(kx, (batch, in_dim), dtype=jnp.float32)
    # nn.Linear-style params (weight stored as (out, in) in torch)
    v = jax.random.normal(kv, (out_dim, in_dim), dtype=jnp.float32) * 0.1
    g = jax.random.normal(kg, (1, 1), dtype=jnp.float32) + 1.0   # scalar gain
    b = jax.random.normal(kb, (1, out_dim), dtype=jnp.float32) * 0.1

    # Pure-JAX reference (exact FCNet semantics).
    w_eff = g[0, 0] * v / jnp.sqrt(jnp.sum(v * v))
    ref = jnp.maximum(x @ w_eff.T + b, 0.0)

    # f32 path: tight tolerance.
    out = fcnet_forward(x, v, g, b)
    out = jax.block_until_ready(out)
    assert out.shape == (batch, out_dim)
    assert jnp.allclose(out, ref, atol=1e-5, rtol=1e-5), "f32 mismatch vs reference"

    # Non-multiple batch exercises the cdiv/pad path (previous version rejected it).
    out13 = jax.block_until_ready(fcnet_forward(x[:13], v, g, b))
    assert jnp.allclose(out13, ref[:13], atol=1e-5, rtol=1e-5), "padded-batch mismatch"

    # bf16 MXU path (f32 accumulation + f32 scale/bias): loose tolerance.
    out_bf16 = jax.block_until_ready(
        fcnet_forward(x, v, g, b, compute_dtype=jnp.bfloat16))
    assert jnp.allclose(out_bf16, ref, atol=2e-2, rtol=2e-2), "bf16 mismatch vs reference"

    print("KERNEL_OK")
</pallas_src>

<mosaic_0001>
module attributes {stable_mosaic.version = 11 : i64} {
  func.func @fcnet_kernel(%arg0: i32, %arg1: i32, %arg2: memref<1x1xf32, #tpu.memory_space<smem>>, %arg3: memref<16x64xf32, #tpu.memory_space<vmem>>, %arg4: memref<64x128xf32, #tpu.memory_space<vmem>>, %arg5: memref<1x128xf32, #tpu.memory_space<vmem>>, %arg6: memref<16x128xf32, #tpu.memory_space<vmem>>) attributes {dimension_semantics = [#tpu.dimension_semantics<parallel>, #tpu.dimension_semantics<parallel>], iteration_bounds = array<i64: 1, 1>, scalar_prefetch = 0 : i64, scratch_operands = 0 : i64, tpu.core_type = #tpu.core_type<tc>, window_params = [{transform_indices = @transform_0, window_bounds = array<i64: 1, 1>}, {transform_indices = @transform_1, window_bounds = array<i64: 16, 64>}, {transform_indices = @transform_2, window_bounds = array<i64: 64, 128>}, {transform_indices = @transform_3, window_bounds = array<i64: 1, 128>}, {transform_indices = @transform_4, window_bounds = array<i64: 16, 128>}]} {
    %c0 = arith.constant 0 : index
    %c0_0 = arith.constant 0 : index
    %0 = vector.load %arg3[%c0, %c0_0] : memref<16x64xf32, #tpu.memory_space<vmem>>, vector<16x64xf32>
    %c0_1 = arith.constant 0 : index
    %c0_2 = arith.constant 0 : index
    %1 = vector.load %arg4[%c0_1, %c0_2] : memref<64x128xf32, #tpu.memory_space<vmem>>, vector<64x128xf32>
    %cst = arith.constant dense<0.000000e+00> : vector<16x128xf32>
    %2 = tpu.matmul %0, %1, %cst {dimension_numbers = #tpu.dot_dimension_numbers<[1], [0], [0], [1], [0, 0, 1, 1], [], []>} : vector<16x64xf32>, vector<64x128xf32>, vector<16x128xf32> -> vector<16x128xf32>
    %c0_3 = arith.constant 0 : index
    %c0_4 = arith.constant 0 : index
    %3 = memref.load %arg2[%c0_3, %c0_4] : memref<1x1xf32, #tpu.memory_space<smem>>
    %4 = vector.broadcast %3 : f32 to vector<16x128xf32>
    %5 = arith.mulf %2, %4 : vector<16x128xf32>
    %c0_5 = arith.constant 0 : index
    %c0_6 = arith.constant 0 : index
    %6 = vector.load %arg5[%c0_5, %c0_6] : memref<1x128xf32, #tpu.memory_space<vmem>>, vector<1x128xf32>
    %7 = vector.broadcast %6 : vector<1x128xf32> to vector<16x128xf32>
    %8 = arith.addf %5, %7 : vector<16x128xf32>
    %cst_7 = arith.constant 0.000000e+00 : f32
    %9 = vector.broadcast %cst_7 : f32 to vector<16x128xf32>
    %10 = arith.maximumf %8, %9 : vector<16x128xf32>
    %c0_8 = arith.constant 0 : index
    %c0_9 = arith.constant 0 : index
    %11 = vector.load %arg6[%c0_8, %c0_9] : memref<16x128xf32, #tpu.memory_space<vmem>>, vector<16x128xf32>
    tpu.vector_store %arg6[%c0_8, %c0_9], %10 {strides = array<i32>} : memref<16x128xf32, #tpu.memory_space<vmem>>, vector<16x128xf32>,
    return
  }
  func.func @transform_0(%arg0: i32, %arg1: i32) -> (i32, i32) {
    %c0_i32 = arith.constant 0 : i32
    %c0_i32_0 = arith.constant 0 : i32
    %c0_i32_1 = arith.constant 0 : i32
    return %c0_i32, %c0_i32_0 : i32, i32
  }
  func.func @transform_1(%arg0: i32, %arg1: i32) -> (i32, i32) {
    %c0_i32 = arith.constant 0 : i32
    %c0_i32_0 = arith.constant 0 : i32
    return %arg0, %c0_i32 : i32, i32
  }
  func.func @transform_2(%arg0: i32, %arg1: i32) -> (i32, i32) {
    %c0_i32 = arith.constant 0 : i32
    %c0_i32_0 = arith.constant 0 : i32
    return %c0_i32, %arg1 : i32, i32
  }
  func.func @transform_3(%arg0: i32, %arg1: i32) -> (i32, i32) {
    %c0_i32 = arith.constant 0 : i32
    %c0_i32_0 = arith.constant 0 : i32
    return %c0_i32, %arg1 : i32, i32
  }
  func.func @transform_4(%arg0: i32, %arg1: i32) -> (i32, i32) {
    %c0_i32 = arith.constant 0 : i32
    return %arg0, %arg1 : i32, i32
  }
}

</mosaic_0001>

<llo_original>
// kernel: tpu_custom_call.1
$region0: #{tpu_custom_call.1}
  #allocation0 [shape = 'u32[]', space=smem, size = 0x4, offset = 0x4, fixed_abs, tag = 'smem constant byte address 0x4 - core index']
  #allocation1 [shape = 'u32[144,128]{1,0:T(1,128)}', space=vmem, size = 0x12000, scoped, tag = 'internal scratch']
  #allocation2 [shape = 'f32[1,1]{1,0:T(1,128)S(6)}', space=smem, size = 0x200, scoped, tag = 'scoped memory for tpu_custom_call.1']
  %s0 = inlined_call_operand.<no memory space> [shape: f32[1,1], index: 0, kind: input, shape index: {}]
  %s1 = inlined_call_operand.hbm [shape: f32[16,64], index: 1, kind: input, shape index: {}]
  %s2 = inlined_call_operand.hbm [shape: f32[64,128], index: 2, kind: input, shape index: {}]
  %s3 = inlined_call_operand.vmem [shape: f32[1,128], index: 3, kind: input, shape index: {}]
  %s4 = inlined_call_operand.hbm [shape: f32[16,128], index: 4, kind: output, shape index: {}]
  %s5 = sld [smem:[#allocation0]]
  $region34: #{tpu_custom_call.1} parent=0
    _
  %s7 = ssub.s32 1, %s5
  %s8 = scalar_select 0, %s7, %s5
  %9 = sst [smem:[#allocation2]] %s0
  $region1: #{tpu_custom_call.1} parent=0
    #allocation3 [shape = 'u8[8192]{0}', space=vmem, size = 0x2000, scoped, tag = 'input window, operand 1, single buffered']
    #allocation4 [shape = 's32[1]{0}', space=sflag, size = 0x4, scoped, tag = 'scoped memory for tpu_custom_call.1']
    #allocation5 [shape = 's32[1]{0}', space=sflag, size = 0x4, scoped, tag = 'scoped memory for tpu_custom_call.1']
    #allocation6 [shape = 'u8[32768]{0}', space=vmem, size = 0x8000, scoped, tag = 'input window, operand 2, single buffered']
    #allocation7 [shape = 's32[1]{0}', space=sflag, size = 0x4, scoped, tag = 'scoped memory for tpu_custom_call.1']
    #allocation8 [shape = 'u8[8192]{0}', space=vmem, size = 0x2000, scoped, tag = 'output window, operand 0, single buffered']
    %10 = vsyncpa [#allocation4], 0
    %11 = vsyncpa [#allocation7], 0
    %12 = vsyncpa [#allocation5], 0
    // Predicated region
    $region2: #{tpu_custom_call.1} parent=1 // pred_check
      _
    $region3: #{tpu_custom_call.1} parent=1 // pred_check_branch
      %14 = sbr.rel (0) target = $region5
    $region4: #{tpu_custom_call.1} parent=1 // pred_region
      _
    $region5: #{tpu_custom_call.1} parent=1 // pred_fallthru
      _
    // Predicated region
    $region6: #{tpu_custom_call.1} parent=1 // pred_check
      _
    $region7: #{tpu_custom_call.1} parent=1 // pred_check_branch
      %16 = sbr.rel (0) target = $region9
    $region8: #{tpu_custom_call.1} parent=1 // pred_region
      %s18 = ssub.s32 256, 256
      %19 = vsyncadd [#allocation4], %s18
      %s20 = sshll.u32 [#allocation3], 4
      %s21 = int_to_ptr.vmem [resolvable:$true] %s20
      %26 = dma.hbm_to_vmem [thread:$0]  %s1, 256, %s21, [#allocation4], 128, 128, 8
    $region9: #{tpu_custom_call.1} parent=1 // pred_fallthru
      _
    // Predicated region
    $region10: #{tpu_custom_call.1} parent=1 // pred_check
      _
    $region11: #{tpu_custom_call.1} parent=1 // pred_check_branch
      %28 = sbr.rel (0) target = $region13
    $region12: #{tpu_custom_call.1} parent=1 // pred_region
      %s30 = ssub.s32 1024, 1024
      %31 = vsyncadd [#allocation7], %s30
      %s32 = sshll.u32 [#allocation6], 4
      %s33 = int_to_ptr.vmem [resolvable:$true] %s32
      %38 = dma.hbm_to_vmem [thread:$0]  %s2, 1024, %s33, [#allocation7], 128, 128, 8
    $region13: #{tpu_custom_call.1} parent=1 // pred_fallthru
      _
    // Predicated region
    $region14: #{tpu_custom_call.1} parent=1 // pred_check
      _
    $region15: #{tpu_custom_call.1} parent=1 // pred_check_branch
      %40 = sbr.rel (0) target = $region17
    $region16: #{tpu_custom_call.1} parent=1 // pred_region
      _
    $region17: #{tpu_custom_call.1} parent=1 // pred_fallthru
      _
    // Predicated region
    $region18: #{tpu_custom_call.1} parent=1 // pred_check
      _
    $region19: #{tpu_custom_call.1} parent=1 // pred_check_branch
      %42 = sbr.rel (0) target = $region21
    $region20: #{tpu_custom_call.1} parent=1 // pred_region
      %43 = dma.done [#allocation4], 256
    $region21: #{tpu_custom_call.1} parent=1 // pred_fallthru
      _
    // Predicated region
    $region22: #{tpu_custom_call.1} parent=1 // pred_check
      _
    $region23: #{tpu_custom_call.1} parent=1 // pred_check_branch
      %45 = sbr.rel (0) target = $region25
    $region24: #{tpu_custom_call.1} parent=1 // pred_region
      %46 = dma.done [#allocation7], 1024
    $region25: #{tpu_custom_call.1} parent=1 // pred_fallthru
      _
    %v47 = vld [vmem:[#allocation3] sm:$0xff]
    %v48 = vld [vmem:[#allocation3 + $0x8] sm:$0xff]
    %v49 = vld [vmem:[#allocation6] sm:$0xff]
    %v50 = vld [vmem:[#allocation6 + $0x8] sm:$0xff]
    %v51 = vld [vmem:[#allocation6 + $0x10] sm:$0xff]
    %v52 = vld [vmem:[#allocation6 + $0x18] sm:$0xff]
    %v53 = vld [vmem:[#allocation6 + $0x20] sm:$0xff]
    %v54 = vld [vmem:[#allocation6 + $0x28] sm:$0xff]
    %v55 = vld [vmem:[#allocation6 + $0x30] sm:$0xff]
    %v56 = vld [vmem:[#allocation6 + $0x38] sm:$0xff]
    %vm57 = vcmask 523264
    %v59 = vsel %vm57, %v47, 0
    %v62 = vsel %vm57, %v48, 0
    %64 = vmatprep.subr.mxu0 0.0
    %65 = vmatpush1.msra.mxu0 0.0
    %66 = vmatprep.subr.mxu0 0.0
    %67 = vmatpush1.msra.mxu0 0.0
    %68 = vmatprep.subr.mxu0 0.0
    %69 = vmatpush1.msra.mxu0 0.0
    %70 = vmatprep.subr.mxu0 0.0
    %71 = vmatpush1.msra.mxu0 0.0
    %72 = vmatprep.subr.mxu0 0.0
    %73 = vmatpush1.msra.mxu0 0.0
    %74 = vmatprep.subr.mxu0 0.0
    %75 = vmatpush1.msra.mxu0 0.0
    %76 = vmatprep.subr.mxu0 0.0
    %77 = vmatpush1.msra.mxu0 0.0
    %78 = vmatprep.subr.mxu0 0.0
    %79 = vmatpush1.msra.mxu0 0.0
    %80 = vmatprep.subr.mxu0 0.0
    %81 = vmatpush1.msra.mxu0 %v56
    %82 = vmatprep.subr.mxu0 0.0
    %83 = vmatpush1.msra.mxu0 %v55
    %84 = vmatprep.subr.mxu0 0.0
    %85 = vmatpush1.msra.mxu0 %v54
    %86 = vmatprep.subr.mxu0 0.0
    %87 = vmatpush1.msra.mxu0 %v53
    %88 = vmatprep.subr.mxu0 0.0
    %89 = vmatpush1.msra.mxu0 %v52
    %90 = vmatprep.subr.mxu0 0.0
    %91 = vmatpush1.msra.mxu0 %v51
    %92 = vmatprep.subr.mxu0 0.0
    %93 = vmatpush1.msra.mxu0 %v50
    %94 = vmatprep.subr.mxu0 0.0
    %95 = vmatpush1.msra.mxu0 %v49
    %96 = vmatprep.subr.mxu0 0.0
    %97 = vmatpush2.msra.mxu0 0.0
    %98 = vmatprep.subr.mxu0 0.0
    %99 = vmatpush2.msra.mxu0 0.0
    %100 = vmatprep.subr.mxu0 0.0
    %101 = vmatpush2.msra.mxu0 0.0
    %102 = vmatprep.subr.mxu0 0.0
    %103 = vmatpush2.msra.mxu0 0.0
    %104 = vmatprep.subr.mxu0 0.0
    %105 = vmatpush2.msra.mxu0 0.0
    %106 = vmatprep.subr.mxu0 0.0
    %107 = vmatpush2.msra.mxu0 0.0
    %108 = vmatprep.subr.mxu0 0.0
    %109 = vmatpush2.msra.mxu0 0.0
    %110 = vmatprep.subr.mxu0 0.0
    %111 = vmatpush2.msra.mxu0 0.0
    %112 = vmatprep.subr.mxu0 0.0
    %113 = vmatpush2.msra.mxu0 0.0
    %114 = vmatprep.subr.mxu0 0.0
    %115 = vmatpush2.msra.mxu0 0.0
    %116 = vmatprep.subr.mxu0 0.0
    %117 = vmatpush2.msra.mxu0 0.0
    %118 = vmatprep.subr.mxu0 0.0
    %119 = vmatpush2.msra.mxu0 0.0
    %120 = vmatprep.subr.mxu0 0.0
    %121 = vmatpush2.msra.mxu0 0.0
    %122 = vmatprep.subr.mxu0 0.0
    %123 = vmatpush2.msra.mxu0 0.0
    %124 = vmatprep.subr.mxu0 0.0
    %125 = vmatpush2.msra.mxu0 0.0
    %126 = vmatprep.subr.mxu0 0.0
    %127 = vmatpush2.msra.mxu0 0.0
    %128 = vmatprep.mubr.f32.mxu0 0.0
    %129 = vmatmul.mubr.f32.gmra.mxu0 %v59
    %v130 = vpop.f32.mrf.mxu0
    %v131 = vadd.f32 0.0, %v130
    %v132 = vpop.f32.mrf.mxu0
    %133 = vmatprep.mubr.f32.mxu0 0.0
    %134 = vmatmul.mubr.f32.gmra.mxu0 %v62
    %v135 = vpop.f32.mrf.mxu0
    %v136 = vadd.f32 0.0, %v135
    %v137 = vpop.f32.mrf.mxu0
    %138 = vdwg.mxu0
    %s139 = sld [smem:[#allocation2]]
    %v140 = vstv %s139
    %v141 = vmul.f32 %v131, %v140
    %v142 = vmul.f32 %v136, %v140
    %v143 = vld [vmem:[%s3] sm:$0x1]
    %v145 = vlaneseq
    %v146 = vshrl.u32 %v145, 7
    %v147 = vsub.s32 0, %v146
    %v148 = vrot.slane %v143, %v147
    %v150 = vadd.f32 %v141, %v148
    %v151 = vadd.f32 %v142, %v148
    %v152 = vmax.f32 %v150, 0.0
    %v153 = vmax.f32 %v151, 0.0
    %154 = vst [vmem:[#allocation8] sm:$0xff] %v152
    %155 = vst [vmem:[#allocation8 + $0x8] sm:$0xff] %v153
    // Predicated region
    $region26: #{tpu_custom_call.1} parent=1 // pred_check
      _
    $region27: #{tpu_custom_call.1} parent=1 // pred_check_branch
      %157 = sbr.rel (0) target = $region29
    $region28: #{tpu_custom_call.1} parent=1 // pred_region
      %s159 = ssub.s32 256, 256
      %160 = vsyncadd [#allocation5], %s159
      %s161 = sshll.u32 [#allocation8], 4
      %s162 = int_to_ptr.vmem [resolvable:$true] %s161
      %167 = dma.vmem_to_hbm [thread:$0]  %s162, 256, %s4, [#allocation5], 128, 128, 8
    $region29: #{tpu_custom_call.1} parent=1 // pred_fallthru
      _
    // Predicated region
    $region30: #{tpu_custom_call.1} parent=1 // pred_check
      _
    $region31: #{tpu_custom_call.1} parent=1 // pred_check_branch
      %169 = sbr.rel (0) target = $region33
    $region32: #{tpu_custom_call.1} parent=1 // pred_region
      %170 = dma.done [#allocation5], 256
    $region33: #{tpu_custom_call.1} parent=1 // pred_fallthru
      _
    %171 = vsyncpa [#allocation4], 1
    %172 = vsyncpa [#allocation7], 1
    %173 = vsyncpa [#allocation5], 1

</llo_original>
